<compile_context>
chip_gen: v7x
topology: tpu7x:2x2x1
jax: 0.10.0
libtpu: 0.0.40
codegen_flags: <defaults>
</compile_context>

<pallas_src>
import jax
import jax.numpy as jnp
from jax.experimental import pallas as pl
from jax.experimental.pallas import tpu as pltpu

_OUT_LANES = 128  # lane-dense output width; real logits live in lanes [0:2]


def _pool_classify_kernel(emb_ref, mask_ref, inv_ref, w_ref, b_ref, out_ref, acc_ref):
    """Masked mean pooling (seq reduction across grid axis 1) + H->2 classifier."""
    s = pl.program_id(1)

    @pl.when(s == 0)
    def _():
        acc_ref[...] = jnp.zeros_like(acc_ref)

    # VPU mask-multiply (mask is exactly 0/1) + sequence reduction, f32 accumulate.
    masked = emb_ref[...].astype(jnp.float32) * mask_ref[...].astype(jnp.float32)
    acc_ref[...] += jnp.sum(masked, axis=1)                       # [tb, H] f32

    @pl.when(s == pl.num_programs(1) - 1)
    def _():
        # nn.Dropout is an identity at inference time -> no-op here.
        pooled = acc_ref[...] * inv_ref[...]                      # [tb, H] masked mean
        logits = jnp.dot(pooled.astype(jnp.bfloat16), w_ref[...],
                         preferred_element_type=jnp.float32) + b_ref[...]
        out_ref[...] = logits.astype(out_ref.dtype)               # [tb, 128] lane-dense


def _vmem_capacity_bytes():
    """Per-core VMEM capacity (falls back to 128 MiB = v5e/v6e)."""
    try:
        return int(getattr(pltpu.get_tpu_info(), "vmem_capacity_bytes", 128 << 20))
    except Exception:  # pragma: no cover - query unavailable in some contexts
        return 128 << 20


def _choose_tiles(batch, seq, hidden, *, vmem_budget_bytes, want_two_batch_tiles):
    """Pick (batch_tile, seq_tile).

    Keeps the double-buffered bf16 emb tile (2*tb*ts*H*2 bytes) under the budget
    and prefers tiles that divide B / S exactly so the wrapper never has to
    re-materialize the [B,S,H] tensor just to pad it.
    """
    # Batch tile: up to 128 rows, 8-aligned; on 2-TC parts leave >= 2 tiles.
    tb = batch if batch <= 128 else 128
    if want_two_batch_tiles and batch >= 16:
        tb = min(tb, max(8, ((batch // 2) // 8) * 8))
    if tb < batch:
        tb = max(8, (tb // 8) * 8)
        while tb > 8 and batch % tb:
            tb -= 8
    # Sequence tile: largest 8-aligned divisor of S whose emb tile fits the budget.
    bytes_per_seq_row = 2 * tb * hidden * 2        # double-buffered bf16
    ts_cap = max(8, vmem_budget_bytes // bytes_per_seq_row)
    if (seq % 8) or ts_cap >= seq:
        ts = seq                                    # full-extent block (always legal)
    else:
        ts = (ts_cap // 8) * 8
        while ts > 8 and seq % ts:
            ts -= 8
    return int(tb), int(ts)


def sentence_bert_classifier_forward(token_emb, attention_mask, weight, bias, *,
                                     tb=None, ts=None):
    """token_emb: [B,S,H] (ideally bf16); attention_mask: [B,S]; weight: [H,2]; bias: [2]."""
    B, S, H = token_emb.shape

    cap = _vmem_capacity_bytes()
    if cap <= (64 << 20):          # v7x-class: 64 MiB per core, 2 TCs per chip
        budget, vmem_limit, want_two = 20 << 20, 48 << 20, True
    else:                          # v5e / v6e: 128 MiB per core, 1 TC
        budget, vmem_limit, want_two = 56 << 20, 100 << 20, False

    tb_auto, ts_auto = _choose_tiles(B, S, H, vmem_budget_bytes=budget,
                                     want_two_batch_tiles=want_two)
    tb = tb_auto if tb is None else tb
    ts = ts_auto if ts is None else ts

    # bf16 token features: cast only if the encoder did not already emit bf16.
    emb = token_emb if token_emb.dtype == jnp.bfloat16 else token_emb.astype(jnp.bfloat16)
    # Mask as [B,S,1] so the seq dim can be tiled with any multiple-of-8 ts.
    mask3 = attention_mask.astype(jnp.bfloat16)[:, :, None]                # [B,S,1]
    # Per-row 1/sum(mask) precomputed in f32 (removes in-kernel reduce + divide).
    denom = jnp.maximum(
        attention_mask.astype(jnp.float32).sum(axis=1, keepdims=True), 1e-9)
    inv_denom = 1.0 / denom                                                # [B,1] f32

    # Lane-dense bf16 classifier: zero-pad [H,2] -> [H,128]; bias stays f32 (post-MXU add).
    w_pad = jnp.zeros((H, _OUT_LANES), jnp.bfloat16).at[:, :2].set(
        weight.astype(jnp.bfloat16))
    b_pad = jnp.zeros((1, _OUT_LANES), jnp.float32).at[:, :2].set(
        bias.astype(jnp.float32))

    nb, ns = pl.cdiv(B, tb), pl.cdiv(S, ts)
    Bp, Sp = nb * tb, ns * ts
    if Bp != B or Sp != S:
        # Fallback only (tile chooser prefers exact divisors, so this is skipped).
        # TODO(synk): for peak perf pad input_ids / attention_mask upstream of the
        # encoder instead of re-materializing the [B,S,H] tensor here.
        emb = jnp.pad(emb, ((0, Bp - B), (0, Sp - S), (0, 0)))
        mask3 = jnp.pad(mask3, ((0, Bp - B), (0, Sp - S), (0, 0)))
        inv_denom = jnp.pad(inv_denom, ((0, Bp - B), (0, 0)))

    out = pl.pallas_call(
        _pool_classify_kernel,
        out_shape=jax.ShapeDtypeStruct((Bp, _OUT_LANES), jnp.float32),
        grid=(nb, ns),
        in_specs=[
            pl.BlockSpec((tb, ts, H), lambda i, s: (i, s, 0)),        # token embeddings
            pl.BlockSpec((tb, ts, 1), lambda i, s: (i, s, 0)),        # attention mask
            pl.BlockSpec((tb, 1), lambda i, s: (i, 0)),               # 1 / sum(mask)
            pl.BlockSpec((H, _OUT_LANES), lambda i, s: (0, 0)),       # classifier W (bf16)
            pl.BlockSpec((1, _OUT_LANES), lambda i, s: (0, 0)),       # classifier b (f32)
        ],
        out_specs=pl.BlockSpec((tb, _OUT_LANES), lambda i, s: (i, 0)),
        scratch_shapes=[pltpu.VMEM((tb, H), jnp.float32)],            # pooled accumulator
        compiler_params=pltpu.CompilerParams(
            dimension_semantics=("parallel", "arbitrary"),  # batch across TCs, seq = reduction
            vmem_limit_bytes=vmem_limit,
        ),
    )(emb, mask3, inv_denom, w_pad, b_pad)

    return out[:B, :2]


def synthetic_encoder(input_ids, token_type_ids, word_emb, type_emb):
    """Glue (gather): per-token features [B, S, H] in the tables' dtype (bf16)."""
    # TODO(synk): the real module uses an external (HuggingFace-style) BERT
    # encoder; its full transformer stack is out of scope and is replaced by a
    # deterministic embedding-lookup encoder with the same output contract.
    return word_emb[input_ids] + type_emb[token_type_ids]


if __name__ == "__main__":
    B, S, H, V = 2, 8, 32, 64

    key = jax.random.PRNGKey(0)
    k_word, k_type, k_w, k_b, k_ids, k_tt = jax.random.split(key, 6)

    # Deterministic synthetic parameters (tables already bf16 so the encoder emits bf16).
    word_emb = (jax.random.normal(k_word, (V, H), jnp.float32) * 0.02).astype(jnp.bfloat16)
    type_emb = (jax.random.normal(k_type, (2, H), jnp.float32) * 0.02).astype(jnp.bfloat16)
    # nn.Linear(H, 2): PyTorch weight [2, H], bias [2] -> stored transposed [H, 2].
    lin_w = (jax.random.normal(k_w, (2, H), jnp.float32) * (1.0 / jnp.sqrt(H))).T
    lin_b = jax.random.normal(k_b, (2,), jnp.float32) * 0.01

    # Deterministic synthetic inputs.
    input_ids = jax.random.randint(k_ids, (B, S), 0, V, dtype=jnp.int32)
    token_type_ids = jax.random.randint(k_tt, (B, S), 0, 2, dtype=jnp.int32)
    attention_mask = jnp.concatenate(
        [jnp.ones((B, S - 2), jnp.int32), jnp.zeros((B, 2), jnp.int32)], axis=1
    )  # last 2 positions are padding

    token_emb = synthetic_encoder(input_ids, token_type_ids, word_emb, type_emb)  # bf16 [B,S,H]
    logits = sentence_bert_classifier_forward(token_emb, attention_mask, lin_w, lin_b)
    logits = jax.block_until_ready(logits)

    # Reference in plain JAX (same math, same bf16 quantization points).
    emb_f32 = token_emb.astype(jnp.float32)
    m = attention_mask.astype(jnp.float32)
    pooled_ref = (emb_f32 * m[:, :, None]).sum(1) / jnp.maximum(
        m.sum(1, keepdims=True), 1e-9)
    w_bf = lin_w.astype(jnp.bfloat16).astype(jnp.float32)
    p_bf = pooled_ref.astype(jnp.bfloat16).astype(jnp.float32)
    logits_ref = p_bf @ w_bf + lin_b

    assert logits.shape == (B, 2)
    assert jnp.allclose(logits, logits_ref, atol=1e-2, rtol=1e-2), "mismatch vs reference"

    print("KERNEL_OK")
</pallas_src>

<mosaic_0001>
module attributes {stable_mosaic.version = 11 : i64} {
  func.func @_pool_classify_kernel(%arg0: i32, %arg1: i32, %arg2: memref<2x8x32xbf16, #tpu.memory_space<vmem>>, %arg3: memref<2x8x1xbf16, #tpu.memory_space<vmem>>, %arg4: memref<2x1xf32, #tpu.memory_space<vmem>>, %arg5: memref<32x128xbf16, #tpu.memory_space<vmem>>, %arg6: memref<1x128xf32, #tpu.memory_space<vmem>>, %arg7: memref<2x128xf32, #tpu.memory_space<vmem>>, %arg8: memref<2x32xf32, #tpu.memory_space<vmem>>) attributes {dimension_semantics = [#tpu.dimension_semantics<parallel>, #tpu.dimension_semantics<arbitrary>], iteration_bounds = array<i64: 1, 1>, scalar_prefetch = 0 : i64, scratch_operands = 1 : i64, tpu.core_type = #tpu.core_type<tc>, window_params = [{transform_indices = @transform_0, window_bounds = array<i64: 2, 8, 32>}, {transform_indices = @transform_1, window_bounds = array<i64: 2, 8, 1>}, {transform_indices = @transform_2, window_bounds = array<i64: 2, 1>}, {pipeline_mode = #tpu.pipeline_mode<synchronous>, transform_indices = @transform_3, window_bounds = array<i64: 32, 128>}, {pipeline_mode = #tpu.pipeline_mode<synchronous>, transform_indices = @transform_4, window_bounds = array<i64: 1, 128>}, {transform_indices = @transform_5, window_bounds = array<i64: 2, 128>}]} {
    %c0_i32 = arith.constant 0 : i32
    %0 = arith.cmpi eq, %arg1, %c0_i32 : i32
    %1 = arith.extui %0 : i1 to i32
    %c0_i32_0 = arith.constant 0 : i32
    %2 = arith.cmpi ne, %1, %c0_i32_0 : i32
    scf.if %2 {
      %cst_12 = arith.constant 0.000000e+00 : f32
      %16 = vector.broadcast %cst_12 : f32 to vector<2x32xf32>
      %c0_13 = arith.constant 0 : index
      %c0_14 = arith.constant 0 : index
      %17 = vector.load %arg8[%c0_13, %c0_14] : memref<2x32xf32, #tpu.memory_space<vmem>>, vector<2x32xf32>
      tpu.vector_store %arg8[%c0_13, %c0_14], %16 {strides = array<i32>} : memref<2x32xf32, #tpu.memory_space<vmem>>, vector<2x32xf32>,
    } else {
    }
    %c0 = arith.constant 0 : index
    %c0_1 = arith.constant 0 : index
    %c0_2 = arith.constant 0 : index
    %3 = vector.load %arg2[%c0, %c0_1, %c0_2] : memref<2x8x32xbf16, #tpu.memory_space<vmem>>, vector<2x8x32xbf16>
    %4 = arith.extf %3 : vector<2x8x32xbf16> to vector<2x8x32xf32>
    %c0_3 = arith.constant 0 : index
    %c0_4 = arith.constant 0 : index
    %c0_5 = arith.constant 0 : index
    %5 = vector.load %arg3[%c0_3, %c0_4, %c0_5] : memref<2x8x1xbf16, #tpu.memory_space<vmem>>, vector<2x8x1xbf16>
    %6 = arith.extf %5 : vector<2x8x1xbf16> to vector<2x8x1xf32>
    %7 = vector.broadcast %6 : vector<2x8x1xf32> to vector<2x8x32xf32>
    %8 = arith.mulf %4, %7 : vector<2x8x32xf32>
    %c0_6 = arith.constant 0 : index
    %c0_7 = arith.constant 0 : index
    %9 = vector.load %arg8[%c0_6, %c0_7] : memref<2x32xf32, #tpu.memory_space<vmem>>, vector<2x32xf32>
    %cst = arith.constant dense<0.000000e+00> : vector<2x32xf32>
    %10 = vector.multi_reduction <add>, %8, %cst [1] : vector<2x8x32xf32> to vector<2x32xf32>
    %11 = arith.addf %9, %10 : vector<2x32xf32>
    %c0_8 = arith.constant 0 : index
    %c0_9 = arith.constant 0 : index
    %12 = vector.load %arg8[%c0_8, %c0_9] : memref<2x32xf32, #tpu.memory_space<vmem>>, vector<2x32xf32>
    tpu.vector_store %arg8[%c0_8, %c0_9], %11 {strides = array<i32>} : memref<2x32xf32, #tpu.memory_space<vmem>>, vector<2x32xf32>,
    %c0_i32_10 = arith.constant 0 : i32
    %13 = arith.cmpi eq, %arg1, %c0_i32_10 : i32
    %14 = arith.extui %13 : i1 to i32
    %c0_i32_11 = arith.constant 0 : i32
    %15 = arith.cmpi ne, %14, %c0_i32_11 : i32
    scf.if %15 {
      %c0_12 = arith.constant 0 : index
      %c0_13 = arith.constant 0 : index
      %16 = vector.load %arg8[%c0_12, %c0_13] : memref<2x32xf32, #tpu.memory_space<vmem>>, vector<2x32xf32>
      %c0_14 = arith.constant 0 : index
      %c0_15 = arith.constant 0 : index
      %17 = vector.load %arg4[%c0_14, %c0_15] : memref<2x1xf32, #tpu.memory_space<vmem>>, vector<2x1xf32>
      %18 = vector.broadcast %17 : vector<2x1xf32> to vector<2x32xf32>
      %19 = arith.mulf %16, %18 : vector<2x32xf32>
      %20 = arith.truncf %19 : vector<2x32xf32> to vector<2x32xbf16>
      %c0_16 = arith.constant 0 : index
      %c0_17 = arith.constant 0 : index
      %21 = vector.load %arg5[%c0_16, %c0_17] : memref<32x128xbf16, #tpu.memory_space<vmem>>, vector<32x128xbf16>
      %cst_18 = arith.constant dense<0.000000e+00> : vector<2x128xf32>
      %22 = tpu.matmul %20, %21, %cst_18 {dimension_numbers = #tpu.dot_dimension_numbers<[1], [0], [0], [1], [0, 0, 1, 1], [], []>} : vector<2x32xbf16>, vector<32x128xbf16>, vector<2x128xf32> -> vector<2x128xf32>
      %c0_19 = arith.constant 0 : index
      %c0_20 = arith.constant 0 : index
      %23 = vector.load %arg6[%c0_19, %c0_20] : memref<1x128xf32, #tpu.memory_space<vmem>>, vector<1x128xf32>
      %24 = vector.broadcast %23 : vector<1x128xf32> to vector<2x128xf32>
      %25 = arith.addf %22, %24 : vector<2x128xf32>
      %c0_21 = arith.constant 0 : index
      %c0_22 = arith.constant 0 : index
      %26 = vector.load %arg7[%c0_21, %c0_22] : memref<2x128xf32, #tpu.memory_space<vmem>>, vector<2x128xf32>
      tpu.vector_store %arg7[%c0_21, %c0_22], %25 {strides = array<i32>} : memref<2x128xf32, #tpu.memory_space<vmem>>, vector<2x128xf32>,
    } else {
    }
    return
  }
  func.func @transform_0(%arg0: i32, %arg1: i32) -> (i32, i32, i32) {
    %c0_i32 = arith.constant 0 : i32
    %c0_i32_0 = arith.constant 0 : i32
    return %arg0, %arg1, %c0_i32 : i32, i32, i32
  }
  func.func @transform_1(%arg0: i32, %arg1: i32) -> (i32, i32, i32) {
    %c0_i32 = arith.constant 0 : i32
    %c0_i32_0 = arith.constant 0 : i32
    return %arg0, %arg1, %c0_i32 : i32, i32, i32
  }
  func.func @transform_2(%arg0: i32, %arg1: i32) -> (i32, i32) {
    %c0_i32 = arith.constant 0 : i32
    %c0_i32_0 = arith.constant 0 : i32
    return %arg0, %c0_i32 : i32, i32
  }
  func.func @transform_3(%arg0: i32, %arg1: i32) -> (i32, i32) {
    %c0_i32 = arith.constant 0 : i32
    %c0_i32_0 = arith.constant 0 : i32
    %c0_i32_1 = arith.constant 0 : i32
    return %c0_i32, %c0_i32_0 : i32, i32
  }
  func.func @transform_4(%arg0: i32, %arg1: i32) -> (i32, i32) {
    %c0_i32 = arith.constant 0 : i32
    %c0_i32_0 = arith.constant 0 : i32
    %c0_i32_1 = arith.constant 0 : i32
    return %c0_i32, %c0_i32_0 : i32, i32
  }
  func.func @transform_5(%arg0: i32, %arg1: i32) -> (i32, i32) {
    %c0_i32 = arith.constant 0 : i32
    %c0_i32_0 = arith.constant 0 : i32
    return %arg0, %c0_i32 : i32, i32
  }
}

</mosaic_0001>

<llo_original>
// kernel: tpu_custom_call.1
$region0: #{tpu_custom_call.1}
  #allocation0 [shape = 'u32[]', space=smem, size = 0x4, offset = 0x4, fixed_abs, tag = 'smem constant byte address 0x4 - core index']
  #allocation1 [shape = 'u32[144,128]{1,0:T(1,128)}', space=vmem, size = 0x12000, scoped, tag = 'internal scratch']
  #allocation2 [shape = 'f32[2,32]{1,0:T(2,128)}', space=vmem, size = 0x400, scoped, tag = 'scratch operand']
  %s0 = inlined_call_operand.hbm [shape: bf16[2,8,32], index: 0, kind: input, shape index: {}]
  %s1 = inlined_call_operand.hbm [shape: bf16[2,8,1], index: 1, kind: input, shape index: {}]
  %s2 = inlined_call_operand.hbm [shape: f32[2,1], index: 2, kind: input, shape index: {}]
  %s3 = inlined_call_operand.hbm [shape: bf16[32,128], index: 3, kind: input, shape index: {}]
  %s4 = inlined_call_operand.hbm [shape: f32[1,128], index: 4, kind: input, shape index: {}]
  %s5 = inlined_call_operand.hbm [shape: f32[2,128], index: 5, kind: output, shape index: {}]
  %s6 = sld [smem:[#allocation0]]
  $region58: #{tpu_custom_call.1} parent=0
    _
  %s8 = ssub.s32 1, %s6
  %s9 = scalar_select 0, %s8, %s6
  $region1: #{tpu_custom_call.1} parent=0
    #allocation3 [shape = 'u8[4096]{0}', space=vmem, size = 0x1000, scoped, tag = 'input window, operand 0, single buffered']
    #allocation4 [shape = 's32[1]{0}', space=sflag, size = 0x4, scoped, tag = 'scoped memory for tpu_custom_call.1']
    #allocation5 [shape = 's32[1]{0}', space=sflag, size = 0x4, scoped, tag = 'scoped memory for tpu_custom_call.1']
    #allocation6 [shape = 'u8[4096]{0}', space=vmem, size = 0x1000, scoped, tag = 'input window, operand 1, single buffered']
    #allocation7 [shape = 's32[1]{0}', space=sflag, size = 0x4, scoped, tag = 'scoped memory for tpu_custom_call.1']
    #allocation8 [shape = 'u8[1024]{0}', space=vmem, size = 0x400, scoped, tag = 'input window, operand 2, single buffered']
    #allocation9 [shape = 'u8[8192]{0}', space=vmem, size = 0x2000, scoped, tag = 'input window, operand 3, single buffered']
    #allocation10 [shape = 's32[1]{0}', space=sflag, size = 0x4, scoped, tag = 'scoped memory for tpu_custom_call.1']
    #allocation11 [shape = 'u8[512]{0}', space=vmem, size = 0x400, scoped, tag = 'input window, operand 4, single buffered']
    #allocation12 [shape = 'u8[1024]{0}', space=vmem, size = 0x400, scoped, tag = 'output window, operand 0, single buffered']
    %10 = vsyncpa [#allocation4], 0
    %11 = vsyncpa [#allocation7], 0
    %12 = vsyncpa [#allocation10], 0
    %13 = vsyncpa [#allocation5], 0
    // Predicated region
    $region2: #{tpu_custom_call.1} parent=1 // pred_check
      _
    $region3: #{tpu_custom_call.1} parent=1 // pred_check_branch
      %15 = sbr.rel (0) target = $region5
    $region4: #{tpu_custom_call.1} parent=1 // pred_region
      %s17 = ssub.s32 128, 128
      %18 = vsyncadd [#allocation4], %s17
      %s19 = sshll.u32 [#allocation3], 4
      %s20 = int_to_ptr.vmem [resolvable:$true] %s19
      %25 = dma.hbm_to_vmem [thread:$0]  %s0, 128, %s20, [#allocation4], 64, 64, 4
    $region5: #{tpu_custom_call.1} parent=1 // pred_fallthru
      _
    // Predicated region
    $region6: #{tpu_custom_call.1} parent=1 // pred_check
      _
    $region7: #{tpu_custom_call.1} parent=1 // pred_check_branch
      %27 = sbr.rel (0) target = $region9
    $region8: #{tpu_custom_call.1} parent=1 // pred_region
      %s29 = ssub.s32 128, 128
      %30 = vsyncadd [#allocation7], %s29
      %s31 = sshll.u32 [#allocation6], 4
      %s32 = int_to_ptr.vmem [resolvable:$true] %s31
      %37 = dma.hbm_to_vmem [thread:$0]  %s1, 128, %s32, [#allocation7], 64, 64, 4
    $region9: #{tpu_custom_call.1} parent=1 // pred_fallthru
      _
    // Predicated region
    $region10: #{tpu_custom_call.1} parent=1 // pred_check
      _
    $region11: #{tpu_custom_call.1} parent=1 // pred_check_branch
      %39 = sbr.rel (0) target = $region13
    $region12: #{tpu_custom_call.1} parent=1 // pred_region
      %s41 = ssub.s32 32, 32
      %42 = vsyncadd [#allocation7], %s41
      %s44 = sshll.u32 [#allocation8], 4
      %s45 = int_to_ptr.vmem [resolvable:$true] %s44
      %47 = dma.hbm_to_vmem [thread:$0]  %s2, 32, %s45, [#allocation7]
    $region13: #{tpu_custom_call.1} parent=1 // pred_fallthru
      _
    // Predicated region
    $region14: #{tpu_custom_call.1} parent=1 // pred_check
      _
    $region15: #{tpu_custom_call.1} parent=1 // pred_check_branch
      %49 = sbr.rel (0) target = $region17
    $region16: #{tpu_custom_call.1} parent=1 // pred_region
      %s51 = ssub.s32 256, 256
      %52 = vsyncadd [#allocation10], %s51
      %s53 = sshll.u32 [#allocation9], 4
      %s54 = int_to_ptr.vmem [resolvable:$true] %s53
      %59 = dma.hbm_to_vmem [thread:$0]  %s3, 256, %s54, [#allocation10], 64, 64, 4
    $region17: #{tpu_custom_call.1} parent=1 // pred_fallthru
      _
    // Predicated region
    $region18: #{tpu_custom_call.1} parent=1 // pred_check
      _
    $region19: #{tpu_custom_call.1} parent=1 // pred_check_branch
      %61 = sbr.rel (0) target = $region21
    $region20: #{tpu_custom_call.1} parent=1 // pred_region
      %s63 = ssub.s32 16, 16
      %64 = vsyncadd [#allocation10], %s63
      %s66 = sshll.u32 [#allocation11], 4
      %s67 = int_to_ptr.vmem [resolvable:$true] %s66
      %69 = dma.hbm_to_vmem [thread:$0]  %s4, 16, %s67, [#allocation10]
    $region21: #{tpu_custom_call.1} parent=1 // pred_fallthru
      _
    // Predicated region
    $region22: #{tpu_custom_call.1} parent=1 // pred_check
      _
    $region23: #{tpu_custom_call.1} parent=1 // pred_check_branch
      %71 = sbr.rel (0) target = $region25
    $region24: #{tpu_custom_call.1} parent=1 // pred_region
      %72 = dma.done [#allocation4], 128
    $region25: #{tpu_custom_call.1} parent=1 // pred_fallthru
      _
    // Predicated region
    $region26: #{tpu_custom_call.1} parent=1 // pred_check
      _
    $region27: #{tpu_custom_call.1} parent=1 // pred_check_branch
      %74 = sbr.rel (0) target = $region29
    $region28: #{tpu_custom_call.1} parent=1 // pred_region
      %75 = dma.done [#allocation7], 128
    $region29: #{tpu_custom_call.1} parent=1 // pred_fallthru
      _
    // Predicated region
    $region30: #{tpu_custom_call.1} parent=1 // pred_check
      _
    $region31: #{tpu_custom_call.1} parent=1 // pred_check_branch
      %77 = sbr.rel (0) target = $region33
    $region32: #{tpu_custom_call.1} parent=1 // pred_region
      %78 = dma.done [#allocation7], 32
    $region33: #{tpu_custom_call.1} parent=1 // pred_fallthru
      _
    // Predicated region
    $region34: #{tpu_custom_call.1} parent=1 // pred_check
      _
    $region35: #{tpu_custom_call.1} parent=1 // pred_check_branch
      %80 = sbr.rel (0) target = $region37
    $region36: #{tpu_custom_call.1} parent=1 // pred_region
      %81 = dma.done [#allocation10], 256
    $region37: #{tpu_custom_call.1} parent=1 // pred_fallthru
      _
    // Predicated region
    $region38: #{tpu_custom_call.1} parent=1 // pred_check
      _
    $region39: #{tpu_custom_call.1} parent=1 // pred_check_branch
      %83 = sbr.rel (0) target = $region41
    $region40: #{tpu_custom_call.1} parent=1 // pred_region
      %84 = dma.done [#allocation10], 16
    $region41: #{tpu_custom_call.1} parent=1 // pred_fallthru
      _
    %p86 = scmp.eq.s32.totalorder 0, 0
    // Predicated region
    $region42: #{tpu_custom_call.1} parent=1 // pred_check
      %p87 = pneg %p86
    $region43: #{tpu_custom_call.1} parent=1 // pred_check_branch
      %89 = sbr.rel (%p87) target = $region45
    $region44: #{tpu_custom_call.1} parent=1 // pred_region
      %vm90 = vcmask 254976
      %91 = vst.msk [vmem:[#allocation2] sm:$0x3] %vm90, 0.0
    $region45: #{tpu_custom_call.1} parent=1 // pred_fallthru
      _
    %v92 = vld [vmem:[#allocation3] sm:$0xf]
    %v93 = vld [vmem:[#allocation3 + $0x4] sm:$0xf]
    %v94 = vunpack.c.l.bf16 %v92
    %v95 = vunpack.c.l.bf16 %v93
    %v96 = vld [vmem:[#allocation6] sm:$0xf]
    %v97 = vld [vmem:[#allocation6 + $0x4] sm:$0xf]
    %v98 = vunpack.c.l.bf16 %v96
    %v99 = vunpack.c.l.bf16 %v97
    %101 = vset.pattern.permute.xlu0 0
    %102 = vperm.xlu0 %101, %v98
    %v103 = vpop.permute.xlu0 %102
    %106 = vset.pattern.permute.xlu0 0
    %107 = vperm.xlu0 %106, %v99
    %v108 = vpop.permute.xlu0 %107
    %v110 = vmul.f32 %v94, %v103
    %v111 = vmul.f32 %v95, %v108
    %v112 = vld [vmem:[#allocation2] sm:$0x3]
    %vm113 = vcmask 261120
    %v114 = vsel %vm113, %v110, 0.0
    %v115 = vrot.slane %v114, 4
    %v116 = vadd.f32 %v114, %v115
    %v117 = vrot.slane %v116, 2
    %v118 = vadd.f32 %v116, %v117
    %v119 = vrot.slane %v118, 1
    %v120 = vadd.f32 %v118, %v119
    %v121 = vsel %vm113, %v111, 0.0
    %v122 = vrot.slane %v121, 4
    %v123 = vadd.f32 %v121, %v122
    %v124 = vrot.slane %v123, 2
    %v125 = vadd.f32 %v123, %v124
    %v126 = vrot.slane %v125, 1
    %v127 = vadd.f32 %v125, %v126
    %vm130 = vcmask 1041409
    %v131 = vsel %vm130, %v127, %v120
    %v133 = vadd.f32 %v112, %v131
    %vm134 = vcmask 254976
    %135 = vst.msk [vmem:[#allocation2] sm:$0x3] %vm134, %v133
    // Predicated region
    $region46: #{tpu_custom_call.1} parent=1 // pred_check
      %p136 = pneg %p86
    $region47: #{tpu_custom_call.1} parent=1 // pred_check_branch
      %138 = sbr.rel (%p136) target = $region49
    $region48: #{tpu_custom_call.1} parent=1 // pred_region
      %v139 = vld [vmem:[#allocation2] sm:$0x3]
      %v140 = vld [vmem:[#allocation8] sm:$0x3]
      %142 = vset.pattern.permute.xlu0 0
      %143 = vperm.xlu0 %142, %v140
      %v144 = vpop.permute.xlu0 %143
      %v146 = vmul.f32 %v139, %v144
      %v147 = vpack.c.bf16 %v146, %v146
      %v148 = vld [vmem:[#allocation9] sm:$0xf]
      %v149 = vld [vmem:[#allocation9 + $0x4] sm:$0xf]
      %v150 = vld [vmem:[#allocation9 + $0x8] sm:$0xf]
      %v151 = vld [vmem:[#allocation9 + $0xc] sm:$0xf]
      %v152 = vld [vmem:[#allocation11] sm:$0x1]
      %v154 = vlaneseq
      %v155 = vshrl.u32 %v154, 7
      %v156 = vsub.s32 0, %v155
      %v157 = vrot.slane %v152, %v156
      %v163 = vunpack.c.l.b16 %v148
      %v164 = vunpack.c.l.b16 %v149
      %v165 = vunpack.c.l.b16 %v150
      %v166 = vunpack.c.l.b16 %v151
      %v167 = vpack.c.b16 %v164, %v163
      %v168 = vpack.c.b16 %v166, %v165
      %v172 = vsel %vm113, %v147, 0
      %174 = vmatprep.subr.bf16.mxu0 0
      %175 = vmatpush1.bf16.msra.mxu0 %v167
      %176 = vmatprep.subr.bf16.mxu0 0
      %177 = vmatpush1.bf16.msra.mxu0 %v168
      %178 = vmatprep.subr.bf16.mxu0 0
      %179 = vmatpush1.bf16.msra.mxu0 0
      %180 = vmatprep.subr.bf16.mxu0 0
      %181 = vmatpush1.bf16.msra.mxu0 0
      %182 = vmatprep.subr.bf16.mxu0 0
      %183 = vmatpush1.bf16.msra.mxu0 0
      %184 = vmatprep.subr.bf16.mxu0 0
      %185 = vmatpush1.bf16.msra.mxu0 0
      %186 = vmatprep.subr.bf16.mxu0 0
      %187 = vmatpush1.bf16.msra.mxu0 0
      %188 = vmatprep.subr.bf16.mxu0 0
      %189 = vmatpush1.bf16.msra.mxu0 0
      %190 = vmatprep.subr.bf16.mxu0 0
      %191 = vmatpush1.bf16.msra.mxu0 0
      %192 = vmatprep.subr.bf16.mxu0 0
      %193 = vmatpush1.bf16.msra.mxu0 0
      %194 = vmatprep.subr.bf16.mxu0 0
      %195 = vmatpush1.bf16.msra.mxu0 0
      %196 = vmatprep.subr.bf16.mxu0 0
      %197 = vmatpush1.bf16.msra.mxu0 0
      %198 = vmatprep.subr.bf16.mxu0 0
      %199 = vmatpush1.bf16.msra.mxu0 0
      %200 = vmatprep.subr.bf16.mxu0 0
      %201 = vmatpush1.bf16.msra.mxu0 0
      %202 = vmatprep.subr.bf16.mxu0 0
      %203 = vmatpush1.bf16.msra.mxu0 0
      %204 = vmatprep.subr.bf16.mxu0 0
      %205 = vmatpush1.bf16.msra.mxu0 0
      %206 = vmatprep.mubr.bf16.mxu0 0
      %207 = vmatmul.mubr.bf16.gmra.mrb[0].mxu0 %v172
      %v208 = vpop.f32.mrb[0].mxu0
      %v209 = vadd.f32 %v157, %v208
      %v210 = vpop.f32.mrb[0].mxu0
      %v211 = vpop.f32.mrb[0].mxu0
      %v212 = vpop.f32.mrb[0].mxu0
      %213 = vdwg.mxu0
      %214 = vst [vmem:[#allocation12] sm:$0x3] %v209
    $region49: #{tpu_custom_call.1} parent=1 // pred_fallthru
      _
    // Predicated region
    $region50: #{tpu_custom_call.1} parent=1 // pred_check
      _
    $region51: #{tpu_custom_call.1} parent=1 // pred_check_branch
      %216 = sbr.rel (0) target = $region53
    $region52: #{tpu_custom_call.1} parent=1 // pred_region
      %s218 = ssub.s32 32, 32
      %219 = vsyncadd [#allocation5], %s218
      %s221 = sshll.u32 [#allocation12], 4
      %s222 = int_to_ptr.vmem [resolvable:$true] %s221
      %224 = dma.vmem_to_hbm [thread:$0]  %s222, 32, %s5, [#allocation5]
    $region53: #{tpu_custom_call.1} parent=1 // pred_fallthru
      _
    // Predicated region
    $region54: #{tpu_custom_call.1} parent=1 // pred_check
      _
    $region55: #{tpu_custom_call.1} parent=1 // pred_check_branch
      %226 = sbr.rel (0) target = $region57
    $region56: #{tpu_custom_call.1} parent=1 // pred_region
      %227 = dma.done [#allocation5], 32
    $region57: #{tpu_custom_call.1} parent=1 // pred_fallthru
      _
    %228 = vsyncpa [#allocation4], 1
    %229 = vsyncpa [#allocation7], 1
    %230 = vsyncpa [#allocation10], 1
    %231 = vsyncpa [#allocation5], 1

</llo_original>
